<compile_context>
chip_gen: v6e
topology: v6e:2x2x1
jax: 0.10.0
libtpu: 0.0.40
codegen_flags: <defaults>
</compile_context>

<pallas_src>
import jax
import jax.numpy as jnp
from jax.experimental import pallas as pl
from jax.experimental.pallas import tpu as pltpu

_TILE_B_CAP = 4096  # double-buffered (tile_b, in_dim) + (tile_b, out_dim) f32 tiles
                    # stay << 16 MiB scoped-VMEM default (v5e) even at this cap.


def mlp_kernel(x_ref,
               w1_ref, b1_ref,
               w2_ref, b2_ref,
               w3_ref, b3_ref,
               w4_ref, b4_ref,
               o_ref):
    # Matmul operands take the weight dtype (f32 exact path, or bf16 on v6e/v7x);
    # accumulation, bias adds and the tanh chain stay f32 (biases are f32).
    cdt = w1_ref.dtype
    x = x_ref[...].astype(cdt)                                         # in-kernel cast (free VPU)
    h = jnp.tanh(jnp.dot(x, w1_ref[...],
                         preferred_element_type=jnp.float32) + b1_ref[...])
    h = jnp.tanh(jnp.dot(h.astype(cdt), w2_ref[...],
                         preferred_element_type=jnp.float32) + b2_ref[...])
    h = jnp.tanh(jnp.dot(h.astype(cdt), w3_ref[...],
                         preferred_element_type=jnp.float32) + b3_ref[...])
    y = jnp.dot(h.astype(cdt), w4_ref[...],
                preferred_element_type=jnp.float32) + b4_ref[...]
    o_ref[...] = y.astype(o_ref.dtype)                                 # (tile_b, out_dim)


def _pick_tile_b(B):
    """Largest batch tile: the whole batch if it fits under the cap (single grid
    step, minimal per-step overhead); otherwise the largest multiple-of-8 divisor
    <= cap, preferring an even step count so v7x megacore splits evenly."""
    if B <= _TILE_B_CAP:
        return B
    cands = [t for t in range(8, _TILE_B_CAP + 1, 8) if B % t == 0]
    if not cands:
        # No legal tile (block 2nd-minor dim must be a multiple of 8 or the full
        # dim): fall back to a single full-batch step; caller may pad B instead.
        return B
    even = [t for t in cands if (B // t) % 2 == 0]
    return max(even) if even else max(cands)


def pick_compute_dtype():
    """bf16 matmul operands only on v6e/v7x; f32 on v5e and earlier (no bf16
    VPU/EUP there, and the MXU is not the binding unit for this kernel)."""
    try:
        kind = jax.devices()[0].device_kind.lower()
    except Exception:
        return jnp.float32
    if ("v6" in kind) or ("v7" in kind):
        return jnp.bfloat16
    return jnp.float32


def mlp_forward(x, params, *, tile_b=None, compute_dtype=jnp.float32):
    """x: [B, input_dim] float32.
    params: dict W1..W4 ([in, out]) and b1..b4 ([1, out]).
    compute_dtype: jnp.float32 (exact) or jnp.bfloat16 (v6e/v7x fast path)."""
    B, in_dim = x.shape
    h1 = params["W1"].shape[1]
    h2 = params["W2"].shape[1]
    h3 = params["W3"].shape[1]
    out_dim = params["W4"].shape[1]

    if tile_b is None:
        tile_b = _pick_tile_b(B)
    assert B % tile_b == 0, "pad the batch to a multiple of tile_b in the caller"

    cdt = compute_dtype
    # Weights are tiny (~KBs): a one-time wrapper cast is negligible.  x is the
    # batch-scaling stream, so it is passed as f32 and cast inside the kernel.
    Ws = [params["W1"].astype(cdt), params["W2"].astype(cdt),
          params["W3"].astype(cdt), params["W4"].astype(cdt)]
    bs = [params["b1"].astype(jnp.float32), params["b2"].astype(jnp.float32),
          params["b3"].astype(jnp.float32), params["b4"].astype(jnp.float32)]

    rep = lambda i: (0, 0)  # weights/biases: same full block every grid step
    in_specs = [pl.BlockSpec((tile_b, in_dim), lambda i: (i, 0))]
    args = [x]
    for W, b in zip(Ws, bs):
        # Constant index map -> block is resident; (pipeline_mode=pl.Buffered(1)
        # would save the dead second buffer, but weights are tiny so we keep the
        # default for maximum lowering compatibility.)
        in_specs.append(pl.BlockSpec(W.shape, rep))
        in_specs.append(pl.BlockSpec(b.shape, rep))
        args.append(W)
        args.append(b)

    flops = 2 * B * (in_dim * h1 + h1 * h2 + h2 * h3 + h3 * out_dim)
    transcendentals = B * (h1 + h2 + h3)
    bytes_accessed = (x.size * x.dtype.itemsize
                      + sum(a.size * a.dtype.itemsize for a in args[1:])
                      + B * out_dim * 4)
    cost = pl.CostEstimate(flops=flops,
                           transcendentals=transcendentals,
                           bytes_accessed=bytes_accessed)

    out = pl.pallas_call(
        mlp_kernel,
        out_shape=jax.ShapeDtypeStruct((B, out_dim), jnp.float32),
        grid_spec=pltpu.PrefetchScalarGridSpec(
            num_scalar_prefetch=0,
            grid=(B // tile_b,),
            in_specs=in_specs,
            # Unpadded output: last block dim == full array dim (legal per the
            # (8,128) rule); masked stores, but 32x fewer writeback bytes than
            # padding out_dim=4 up to 128 lanes.
            out_specs=pl.BlockSpec((tile_b, out_dim), lambda i: (i, 0)),
        ),
        compiler_params=pltpu.CompilerParams(
            dimension_semantics=("parallel",)),
        cost_estimate=cost,
    )(*args)
    return out


def init_params(key, input_dim, output_dim, h1, h2, h3):
    """Deterministic init mirroring nn.Linear's U(-1/sqrt(fan_in), 1/sqrt(fan_in))."""
    dims = [(input_dim, h1), (h1, h2), (h2, h3), (h3, output_dim)]
    params = {}
    for i, (fan_in, fan_out) in enumerate(dims, start=1):
        key, kw, kb = jax.random.split(key, 3)
        bound = 1.0 / (fan_in ** 0.5)
        params[f"W{i}"] = jax.random.uniform(
            kw, (fan_in, fan_out), jnp.float32, minval=-bound, maxval=bound)
        params[f"b{i}"] = jax.random.uniform(
            kb, (1, fan_out), jnp.float32, minval=-bound, maxval=bound)
    return params


def mlp_reference(x, params):
    h = jnp.tanh(x @ params["W1"] + params["b1"])
    h = jnp.tanh(h @ params["W2"] + params["b2"])
    h = jnp.tanh(h @ params["W3"] + params["b3"])
    return h @ params["W4"] + params["b4"]


if __name__ == "__main__":
    input_dim, output_dim = 16, 4
    h1, h2, h3 = 32, 32, 32
    batch = 64  # B <= cap -> single grid step (no per-step overhead paid)

    key = jax.random.PRNGKey(0)
    key, kx = jax.random.split(key)
    x = jax.random.normal(kx, (batch, input_dim), jnp.float32)
    params = init_params(key, input_dim, output_dim, h1, h2, h3)

    ref = mlp_reference(x, params)

    # Exact f32 path.
    out_f32 = jax.block_until_ready(mlp_forward(x, params))
    assert out_f32.shape == (batch, output_dim)
    assert jnp.allclose(out_f32, ref, atol=1e-5, rtol=1e-5)

    # Generation-gated compute dtype: bf16 matmuls on v6e/v7x, f32 on v5e and older.
    auto_dtype = pick_compute_dtype()
    out_auto = jax.block_until_ready(
        mlp_forward(x, params, compute_dtype=auto_dtype))
    assert out_auto.shape == (batch, output_dim)
    if auto_dtype == jnp.bfloat16:
        assert jnp.allclose(out_auto, ref, atol=5e-2, rtol=5e-2)
    else:
        assert jnp.allclose(out_auto, ref, atol=1e-5, rtol=1e-5)

    print("KERNEL_OK")
</pallas_src>

<mosaic_0001>
module attributes {stable_mosaic.version = 11 : i64} {
  func.func @mlp_kernel(%arg0: i32, %arg1: memref<64x16xf32, #tpu.memory_space<vmem>>, %arg2: memref<16x32xf32, #tpu.memory_space<vmem>>, %arg3: memref<1x32xf32, #tpu.memory_space<vmem>>, %arg4: memref<32x32xf32, #tpu.memory_space<vmem>>, %arg5: memref<1x32xf32, #tpu.memory_space<vmem>>, %arg6: memref<32x32xf32, #tpu.memory_space<vmem>>, %arg7: memref<1x32xf32, #tpu.memory_space<vmem>>, %arg8: memref<32x4xf32, #tpu.memory_space<vmem>>, %arg9: memref<1x4xf32, #tpu.memory_space<vmem>>, %arg10: memref<64x4xf32, #tpu.memory_space<vmem>>) attributes {dimension_semantics = [#tpu.dimension_semantics<parallel>], iteration_bounds = array<i64: 1>, scalar_prefetch = 0 : i64, scratch_operands = 0 : i64, tpu.core_type = #tpu.core_type<tc>, window_params = [{transform_indices = @transform_0, window_bounds = array<i64: 64, 16>}, {pipeline_mode = #tpu.pipeline_mode<synchronous>, transform_indices = @transform_1, window_bounds = array<i64: 16, 32>}, {pipeline_mode = #tpu.pipeline_mode<synchronous>, transform_indices = @transform_2, window_bounds = array<i64: 1, 32>}, {pipeline_mode = #tpu.pipeline_mode<synchronous>, transform_indices = @transform_3, window_bounds = array<i64: 32, 32>}, {pipeline_mode = #tpu.pipeline_mode<synchronous>, transform_indices = @transform_4, window_bounds = array<i64: 1, 32>}, {pipeline_mode = #tpu.pipeline_mode<synchronous>, transform_indices = @transform_5, window_bounds = array<i64: 32, 32>}, {pipeline_mode = #tpu.pipeline_mode<synchronous>, transform_indices = @transform_6, window_bounds = array<i64: 1, 32>}, {pipeline_mode = #tpu.pipeline_mode<synchronous>, transform_indices = @transform_7, window_bounds = array<i64: 32, 4>}, {pipeline_mode = #tpu.pipeline_mode<synchronous>, transform_indices = @transform_8, window_bounds = array<i64: 1, 4>}, {transform_indices = @transform_9, window_bounds = array<i64: 64, 4>}]} {
    %c0 = arith.constant 0 : index
    %c0_0 = arith.constant 0 : index
    %0 = vector.load %arg1[%c0, %c0_0] : memref<64x16xf32, #tpu.memory_space<vmem>>, vector<64x16xf32>
    %c0_1 = arith.constant 0 : index
    %c0_2 = arith.constant 0 : index
    %1 = vector.load %arg2[%c0_1, %c0_2] : memref<16x32xf32, #tpu.memory_space<vmem>>, vector<16x32xf32>
    %cst = arith.constant dense<0.000000e+00> : vector<64x32xf32>
    %2 = tpu.matmul %0, %1, %cst {dimension_numbers = #tpu.dot_dimension_numbers<[1], [0], [0], [1], [0, 0, 1, 1], [], []>} : vector<64x16xf32>, vector<16x32xf32>, vector<64x32xf32> -> vector<64x32xf32>
    %c0_3 = arith.constant 0 : index
    %c0_4 = arith.constant 0 : index
    %3 = vector.load %arg3[%c0_3, %c0_4] : memref<1x32xf32, #tpu.memory_space<vmem>>, vector<1x32xf32>
    %4 = vector.broadcast %3 : vector<1x32xf32> to vector<64x32xf32>
    %5 = arith.addf %2, %4 : vector<64x32xf32>
    %6 = math.tanh %5 : vector<64x32xf32>
    %c0_5 = arith.constant 0 : index
    %c0_6 = arith.constant 0 : index
    %7 = vector.load %arg4[%c0_5, %c0_6] : memref<32x32xf32, #tpu.memory_space<vmem>>, vector<32x32xf32>
    %cst_7 = arith.constant dense<0.000000e+00> : vector<64x32xf32>
    %8 = tpu.matmul %6, %7, %cst_7 {dimension_numbers = #tpu.dot_dimension_numbers<[1], [0], [0], [1], [0, 0, 1, 1], [], []>} : vector<64x32xf32>, vector<32x32xf32>, vector<64x32xf32> -> vector<64x32xf32>
    %c0_8 = arith.constant 0 : index
    %c0_9 = arith.constant 0 : index
    %9 = vector.load %arg5[%c0_8, %c0_9] : memref<1x32xf32, #tpu.memory_space<vmem>>, vector<1x32xf32>
    %10 = vector.broadcast %9 : vector<1x32xf32> to vector<64x32xf32>
    %11 = arith.addf %8, %10 : vector<64x32xf32>
    %12 = math.tanh %11 : vector<64x32xf32>
    %c0_10 = arith.constant 0 : index
    %c0_11 = arith.constant 0 : index
    %13 = vector.load %arg6[%c0_10, %c0_11] : memref<32x32xf32, #tpu.memory_space<vmem>>, vector<32x32xf32>
    %cst_12 = arith.constant dense<0.000000e+00> : vector<64x32xf32>
    %14 = tpu.matmul %12, %13, %cst_12 {dimension_numbers = #tpu.dot_dimension_numbers<[1], [0], [0], [1], [0, 0, 1, 1], [], []>} : vector<64x32xf32>, vector<32x32xf32>, vector<64x32xf32> -> vector<64x32xf32>
    %c0_13 = arith.constant 0 : index
    %c0_14 = arith.constant 0 : index
    %15 = vector.load %arg7[%c0_13, %c0_14] : memref<1x32xf32, #tpu.memory_space<vmem>>, vector<1x32xf32>
    %16 = vector.broadcast %15 : vector<1x32xf32> to vector<64x32xf32>
    %17 = arith.addf %14, %16 : vector<64x32xf32>
    %18 = math.tanh %17 : vector<64x32xf32>
    %c0_15 = arith.constant 0 : index
    %c0_16 = arith.constant 0 : index
    %19 = vector.load %arg8[%c0_15, %c0_16] : memref<32x4xf32, #tpu.memory_space<vmem>>, vector<32x4xf32>
    %cst_17 = arith.constant dense<0.000000e+00> : vector<64x4xf32>
    %20 = tpu.matmul %18, %19, %cst_17 {dimension_numbers = #tpu.dot_dimension_numbers<[1], [0], [0], [1], [0, 0, 1, 1], [], []>} : vector<64x32xf32>, vector<32x4xf32>, vector<64x4xf32> -> vector<64x4xf32>
    %c0_18 = arith.constant 0 : index
    %c0_19 = arith.constant 0 : index
    %21 = vector.load %arg9[%c0_18, %c0_19] : memref<1x4xf32, #tpu.memory_space<vmem>>, vector<1x4xf32>
    %22 = vector.broadcast %21 : vector<1x4xf32> to vector<64x4xf32>
    %23 = arith.addf %20, %22 : vector<64x4xf32>
    %c0_20 = arith.constant 0 : index
    %c0_21 = arith.constant 0 : index
    %24 = vector.load %arg10[%c0_20, %c0_21] : memref<64x4xf32, #tpu.memory_space<vmem>>, vector<64x4xf32>
    tpu.vector_store %arg10[%c0_20, %c0_21], %23 {strides = array<i32>} : memref<64x4xf32, #tpu.memory_space<vmem>>, vector<64x4xf32>,
    return
  }
  func.func @transform_0(%arg0: i32) -> (i32, i32) {
    %c0_i32 = arith.constant 0 : i32
    %c0_i32_0 = arith.constant 0 : i32
    return %arg0, %c0_i32 : i32, i32
  }
  func.func @transform_1(%arg0: i32) -> (i32, i32) {
    %c0_i32 = arith.constant 0 : i32
    %c0_i32_0 = arith.constant 0 : i32
    %c0_i32_1 = arith.constant 0 : i32
    return %c0_i32, %c0_i32_0 : i32, i32
  }
  func.func @transform_2(%arg0: i32) -> (i32, i32) {
    %c0_i32 = arith.constant 0 : i32
    %c0_i32_0 = arith.constant 0 : i32
    %c0_i32_1 = arith.constant 0 : i32
    return %c0_i32, %c0_i32_0 : i32, i32
  }
  func.func @transform_3(%arg0: i32) -> (i32, i32) {
    %c0_i32 = arith.constant 0 : i32
    %c0_i32_0 = arith.constant 0 : i32
    %c0_i32_1 = arith.constant 0 : i32
    return %c0_i32, %c0_i32_0 : i32, i32
  }
  func.func @transform_4(%arg0: i32) -> (i32, i32) {
    %c0_i32 = arith.constant 0 : i32
    %c0_i32_0 = arith.constant 0 : i32
    %c0_i32_1 = arith.constant 0 : i32
    return %c0_i32, %c0_i32_0 : i32, i32
  }
  func.func @transform_5(%arg0: i32) -> (i32, i32) {
    %c0_i32 = arith.constant 0 : i32
    %c0_i32_0 = arith.constant 0 : i32
    %c0_i32_1 = arith.constant 0 : i32
    return %c0_i32, %c0_i32_0 : i32, i32
  }
  func.func @transform_6(%arg0: i32) -> (i32, i32) {
    %c0_i32 = arith.constant 0 : i32
    %c0_i32_0 = arith.constant 0 : i32
    %c0_i32_1 = arith.constant 0 : i32
    return %c0_i32, %c0_i32_0 : i32, i32
  }
  func.func @transform_7(%arg0: i32) -> (i32, i32) {
    %c0_i32 = arith.constant 0 : i32
    %c0_i32_0 = arith.constant 0 : i32
    %c0_i32_1 = arith.constant 0 : i32
    return %c0_i32, %c0_i32_0 : i32, i32
  }
  func.func @transform_8(%arg0: i32) -> (i32, i32) {
    %c0_i32 = arith.constant 0 : i32
    %c0_i32_0 = arith.constant 0 : i32
    %c0_i32_1 = arith.constant 0 : i32
    return %c0_i32, %c0_i32_0 : i32, i32
  }
  func.func @transform_9(%arg0: i32) -> (i32, i32) {
    %c0_i32 = arith.constant 0 : i32
    %c0_i32_0 = arith.constant 0 : i32
    return %arg0, %c0_i32 : i32, i32
  }
}

</mosaic_0001>

<llo_original>
// kernel: tpu_custom_call.1
$region0: #{tpu_custom_call.1}
  #allocation0 [shape = 'u32[]', space=smem, size = 0x4, offset = 0x4, fixed_abs, tag = 'smem constant byte address 0x4 - core index']
  #allocation1 [shape = 'u32[144,128]{1,0:T(1,128)}', space=vmem, size = 0x12000, scoped, tag = 'internal scratch']
  %s0 = inlined_call_operand.vmem [shape: f32[64,16], index: 0, kind: input, shape index: {}]
  %s1 = inlined_call_operand.vmem [shape: f32[16,32], index: 1, kind: input, shape index: {}]
  %s2 = inlined_call_operand.vmem [shape: f32[1,32], index: 2, kind: input, shape index: {}]
  %s3 = inlined_call_operand.vmem [shape: f32[32,32], index: 3, kind: input, shape index: {}]
  %s4 = inlined_call_operand.vmem [shape: f32[1,32], index: 4, kind: input, shape index: {}]
  %s5 = inlined_call_operand.vmem [shape: f32[32,32], index: 5, kind: input, shape index: {}]
  %s6 = inlined_call_operand.vmem [shape: f32[1,32], index: 6, kind: input, shape index: {}]
  %s7 = inlined_call_operand.vmem [shape: f32[32,4], index: 7, kind: input, shape index: {}]
  %s8 = inlined_call_operand.vmem [shape: f32[1,4], index: 8, kind: input, shape index: {}]
  %s9 = inlined_call_operand.vmem [shape: f32[64,4], index: 9, kind: output, shape index: {}]
  %s10 = sld [smem:[#allocation0]]
  $region46: #{tpu_custom_call.1} parent=0
    _
  %s12 = ssub.s32 1, %s10
  %s13 = scalar_select 0, %s12, %s10
  // Predicated region
  $region2: #{tpu_custom_call.1} parent=0 // pred_check
    _
  $region3: #{tpu_custom_call.1} parent=0 // pred_check_branch
    %15 = sbr.rel (0) target = $region5
  $region4: #{tpu_custom_call.1} parent=0 // pred_region
    _
  $region5: #{tpu_custom_call.1} parent=0 // pred_fallthru
    _
  // Predicated region
  $region6: #{tpu_custom_call.1} parent=0 // pred_check
    _
  $region7: #{tpu_custom_call.1} parent=0 // pred_check_branch
    %17 = sbr.rel (0) target = $region9
  $region8: #{tpu_custom_call.1} parent=0 // pred_region
    _
  $region9: #{tpu_custom_call.1} parent=0 // pred_fallthru
    _
  // Predicated region
  $region10: #{tpu_custom_call.1} parent=0 // pred_check
    _
  $region11: #{tpu_custom_call.1} parent=0 // pred_check_branch
    %19 = sbr.rel (0) target = $region13
  $region12: #{tpu_custom_call.1} parent=0 // pred_region
    _
  $region13: #{tpu_custom_call.1} parent=0 // pred_fallthru
    _
  // Predicated region
  $region14: #{tpu_custom_call.1} parent=0 // pred_check
    _
  $region15: #{tpu_custom_call.1} parent=0 // pred_check_branch
    %21 = sbr.rel (0) target = $region17
  $region16: #{tpu_custom_call.1} parent=0 // pred_region
    _
  $region17: #{tpu_custom_call.1} parent=0 // pred_fallthru
    _
  // Predicated region
  $region18: #{tpu_custom_call.1} parent=0 // pred_check
    _
  $region19: #{tpu_custom_call.1} parent=0 // pred_check_branch
    %23 = sbr.rel (0) target = $region21
  $region20: #{tpu_custom_call.1} parent=0 // pred_region
    _
  $region21: #{tpu_custom_call.1} parent=0 // pred_fallthru
    _
  // Predicated region
  $region22: #{tpu_custom_call.1} parent=0 // pred_check
    _
  $region23: #{tpu_custom_call.1} parent=0 // pred_check_branch
    %25 = sbr.rel (0) target = $region25
  $region24: #{tpu_custom_call.1} parent=0 // pred_region
    _
  $region25: #{tpu_custom_call.1} parent=0 // pred_fallthru
    _
  // Predicated region
  $region26: #{tpu_custom_call.1} parent=0 // pred_check
    _
  $region27: #{tpu_custom_call.1} parent=0 // pred_check_branch
    %27 = sbr.rel (0) target = $region29
  $region28: #{tpu_custom_call.1} parent=0 // pred_region
    _
  $region29: #{tpu_custom_call.1} parent=0 // pred_fallthru
    _
  // Predicated region
  $region30: #{tpu_custom_call.1} parent=0 // pred_check
    _
  $region31: #{tpu_custom_call.1} parent=0 // pred_check_branch
    %29 = sbr.rel (0) target = $region33
  $region32: #{tpu_custom_call.1} parent=0 // pred_region
    _
  $region33: #{tpu_custom_call.1} parent=0 // pred_fallthru
    _
  // Predicated region
  $region34: #{tpu_custom_call.1} parent=0 // pred_check
    _
  $region35: #{tpu_custom_call.1} parent=0 // pred_check_branch
    %31 = sbr.rel (0) target = $region37
  $region36: #{tpu_custom_call.1} parent=0 // pred_region
    _
  $region37: #{tpu_custom_call.1} parent=0 // pred_fallthru
    _
  %v32 = vld [vmem:[%s0] sm:$0xff]
  %v33 = vld [vmem:[%s0 + $0x8] sm:$0xff]
  %v34 = vld [vmem:[%s0 + $0x10] sm:$0xff]
  %v35 = vld [vmem:[%s0 + $0x18] sm:$0xff]
  %v36 = vld [vmem:[%s0 + $0x20] sm:$0xff]
  %v37 = vld [vmem:[%s0 + $0x28] sm:$0xff]
  %v38 = vld [vmem:[%s0 + $0x30] sm:$0xff]
  %v39 = vld [vmem:[%s0 + $0x38] sm:$0xff]
  %v40 = vld [vmem:[%s1] sm:$0xff]
  %v41 = vld [vmem:[%s1 + $0x8] sm:$0xff]
  %v42 = vld [vmem:[%s2] sm:$0x1]
  %v44 = vlaneseq
  %v45 = vshrl.u32 %v44, 7
  %v46 = vsub.s32 0, %v45
  %v47 = vrot.slane %v42, %v46
  %vm49 = vcmask 130048
  %v51 = vsel %vm49, %v32, 0
  %v54 = vsel %vm49, %v33, 0
  %v57 = vsel %vm49, %v34, 0
  %v60 = vsel %vm49, %v35, 0
  %v63 = vsel %vm49, %v36, 0
  %v66 = vsel %vm49, %v37, 0
  %v69 = vsel %vm49, %v38, 0
  %v72 = vsel %vm49, %v39, 0
  %74 = vmatprep.subr.mxu0 0.0
  %75 = vmatpush1.msra.mxu0 0.0
  %76 = vmatprep.subr.mxu0 0.0
  %77 = vmatpush1.msra.mxu0 0.0
  %78 = vmatprep.subr.mxu0 0.0
  %79 = vmatpush1.msra.mxu0 0.0
  %80 = vmatprep.subr.mxu0 0.0
  %81 = vmatpush1.msra.mxu0 0.0
  %82 = vmatprep.subr.mxu0 0.0
  %83 = vmatpush1.msra.mxu0 0.0
  %84 = vmatprep.subr.mxu0 0.0
  %85 = vmatpush1.msra.mxu0 0.0
  %86 = vmatprep.subr.mxu0 0.0
  %87 = vmatpush1.msra.mxu0 0.0
  %88 = vmatprep.subr.mxu0 0.0
  %89 = vmatpush1.msra.mxu0 0.0
  %90 = vmatprep.subr.mxu0 0.0
  %91 = vmatpush1.msra.mxu0 0.0
  %92 = vmatprep.subr.mxu0 0.0
  %93 = vmatpush1.msra.mxu0 0.0
  %94 = vmatprep.subr.mxu0 0.0
  %95 = vmatpush1.msra.mxu0 0.0
  %96 = vmatprep.subr.mxu0 0.0
  %97 = vmatpush1.msra.mxu0 0.0
  %98 = vmatprep.subr.mxu0 0.0
  %99 = vmatpush1.msra.mxu0 0.0
  %100 = vmatprep.subr.mxu0 0.0
  %101 = vmatpush1.msra.mxu0 0.0
  %102 = vmatprep.subr.mxu0 0.0
  %103 = vmatpush1.msra.mxu0 %v41
  %104 = vmatprep.subr.mxu0 0.0
  %105 = vmatpush1.msra.mxu0 %v40
  %106 = vmatprep.subr.mxu0 0.0
  %107 = vmatpush2.msra.mxu0 0.0
  %108 = vmatprep.subr.mxu0 0.0
  %109 = vmatpush2.msra.mxu0 0.0
  %110 = vmatprep.subr.mxu0 0.0
  %111 = vmatpush2.msra.mxu0 0.0
  %112 = vmatprep.subr.mxu0 0.0
  %113 = vmatpush2.msra.mxu0 0.0
  %114 = vmatprep.subr.mxu0 0.0
  %115 = vmatpush2.msra.mxu0 0.0
  %116 = vmatprep.subr.mxu0 0.0
  %117 = vmatpush2.msra.mxu0 0.0
  %118 = vmatprep.subr.mxu0 0.0
  %119 = vmatpush2.msra.mxu0 0.0
  %120 = vmatprep.subr.mxu0 0.0
  %121 = vmatpush2.msra.mxu0 0.0
  %122 = vmatprep.subr.mxu0 0.0
  %123 = vmatpush2.msra.mxu0 0.0
  %124 = vmatprep.subr.mxu0 0.0
  %125 = vmatpush2.msra.mxu0 0.0
  %126 = vmatprep.subr.mxu0 0.0
  %127 = vmatpush2.msra.mxu0 0.0
  %128 = vmatprep.subr.mxu0 0.0
  %129 = vmatpush2.msra.mxu0 0.0
  %130 = vmatprep.subr.mxu0 0.0
  %131 = vmatpush2.msra.mxu0 0.0
  %132 = vmatprep.subr.mxu0 0.0
  %133 = vmatpush2.msra.mxu0 0.0
  %134 = vmatprep.subr.mxu0 0.0
  %135 = vmatpush2.msra.mxu0 0.0
  %136 = vmatprep.subr.mxu0 0.0
  %137 = vmatpush2.msra.mxu0 0.0
  %138 = vmatprep.mubr.f32.mxu0 0.0
  %139 = vmatmul.mubr.f32.gmra.mxu0 %v51
  %v140 = vpop.f32.mrf.mxu0
  %v141 = vadd.f32 %v47, %v140
  %v142 = vpop.f32.mrf.mxu0
  %143 = vmatprep.mubr.f32.mxu0 0.0
  %144 = vmatmul.mubr.f32.gmra.mxu0 %v54
  %v145 = vpop.f32.mrf.mxu0
  %v146 = vadd.f32 %v47, %v145
  %v147 = vpop.f32.mrf.mxu0
  %148 = vmatprep.mubr.f32.mxu0 0.0
  %149 = vmatmul.mubr.f32.gmra.mxu0 %v57
  %v150 = vpop.f32.mrf.mxu0
  %v151 = vadd.f32 %v47, %v150
  %v152 = vpop.f32.mrf.mxu0
  %153 = vmatprep.mubr.f32.mxu0 0.0
  %154 = vmatmul.mubr.f32.gmra.mxu0 %v60
  %v155 = vpop.f32.mrf.mxu0
  %v156 = vadd.f32 %v47, %v155
  %v157 = vpop.f32.mrf.mxu0
  %158 = vmatprep.mubr.f32.mxu0 0.0
  %159 = vmatmul.mubr.f32.gmra.mxu0 %v63
  %v160 = vpop.f32.mrf.mxu0
  %v161 = vadd.f32 %v47, %v160
  %v162 = vpop.f32.mrf.mxu0
  %163 = vmatprep.mubr.f32.mxu0 0.0
  %164 = vmatmul.mubr.f32.gmra.mxu0 %v66
  %v165 = vpop.f32.mrf.mxu0
  %v166 = vadd.f32 %v47, %v165
  %v167 = vpop.f32.mrf.mxu0
  %168 = vmatprep.mubr.f32.mxu0 0.0
  %169 = vmatmul.mubr.f32.gmra.mxu0 %v69
  %v170 = vpop.f32.mrf.mxu0
  %v171 = vadd.f32 %v47, %v170
  %v172 = vpop.f32.mrf.mxu0
  %173 = vmatprep.mubr.f32.mxu0 0.0
  %174 = vmatmul.mubr.f32.gmra.mxu0 %v72
  %v175 = vpop.f32.mrf.mxu0
  %v176 = vadd.f32 %v47, %v175
  %v177 = vpop.f32.mrf.mxu0
  %178 = vdwg.mxu0
  %v179 = vtanh.pop %v141
  %v180 = vtanh.pop %v146
  %v181 = vtanh.pop %v151
  %v182 = vtanh.pop %v156
  %v183 = vtanh.pop %v161
  %v184 = vtanh.pop %v166
  %v185 = vtanh.pop %v171
  %v186 = vtanh.pop %v176
  %v187 = vld [vmem:[%s3] sm:$0xff]
  %v188 = vld [vmem:[%s3 + $0x8] sm:$0xff]
  %v189 = vld [vmem:[%s3 + $0x10] sm:$0xff]
  %v190 = vld [vmem:[%s3 + $0x18] sm:$0xff]
  %v191 = vld [vmem:[%s4] sm:$0x1]
  %v193 = vlaneseq
  %v194 = vshrl.u32 %v193, 7
  %v195 = vsub.s32 0, %v194
  %v196 = vrot.slane %v191, %v195
  %vm198 = vcmask 261120
  %v200 = vsel %vm198, %v179, 0
  %v203 = vsel %vm198, %v180, 0
  %v206 = vsel %vm198, %v181, 0
  %v209 = vsel %vm198, %v182, 0
  %v212 = vsel %vm198, %v183, 0
  %v215 = vsel %vm198, %v184, 0
  %v218 = vsel %vm198, %v185, 0
  %v221 = vsel %vm198, %v186, 0
  %223 = vmatprep.subr.mxu0 0.0
  %224 = vmatpush1.msra.mxu0 0.0
  %225 = vmatprep.subr.mxu0 0.0
  %226 = vmatpush1.msra.mxu0 0.0
  %227 = vmatprep.subr.mxu0 0.0
  %228 = vmatpush1.msra.mxu0 0.0
  %229 = vmatprep.subr.mxu0 0.0
  %230 = vmatpush1.msra.mxu0 0.0
  %231 = vmatprep.subr.mxu0 0.0
  %232 = vmatpush1.msra.mxu0 0.0
  %233 = vmatprep.subr.mxu0 0.0
  %234 = vmatpush1.msra.mxu0 0.0
  %235 = vmatprep.subr.mxu0 0.0
  %236 = vmatpush1.msra.mxu0 0.0
  %237 = vmatprep.subr.mxu0 0.0
  %238 = vmatpush1.msra.mxu0 0.0
  %239 = vmatprep.subr.mxu0 0.0
  %240 = vmatpush1.msra.mxu0 0.0
  %241 = vmatprep.subr.mxu0 0.0
  %242 = vmatpush1.msra.mxu0 0.0
  %243 = vmatprep.subr.mxu0 0.0
  %244 = vmatpush1.msra.mxu0 0.0
  %245 = vmatprep.subr.mxu0 0.0
  %246 = vmatpush1.msra.mxu0 0.0
  %247 = vmatprep.subr.mxu0 0.0
  %248 = vmatpush1.msra.mxu0 %v190
  %249 = vmatprep.subr.mxu0 0.0
  %250 = vmatpush1.msra.mxu0 %v189
  %251 = vmatprep.subr.mxu0 0.0
  %252 = vmatpush1.msra.mxu0 %v188
  %253 = vmatprep.subr.mxu0 0.0
  %254 = vmatpush1.msra.mxu0 %v187
  %255 = vmatprep.subr.mxu0 0.0
  %256 = vmatpush2.msra.mxu0 0.0
  %257 = vmatprep.subr.mxu0 0.0
  %258 = vmatpush2.msra.mxu0 0.0
  %259 = vmatprep.subr.mxu0 0.0
  %260 = vmatpush2.msra.mxu0 0.0
  %261 = vmatprep.subr.mxu0 0.0
  %262 = vmatpush2.msra.mxu0 0.0
  %263 = vmatprep.subr.mxu0 0.0
  %264 = vmatpush2.msra.mxu0 0.0
  %265 = vmatprep.subr.mxu0 0.0
  %266 = vmatpush2.msra.mxu0 0.0
  %267 = vmatprep.subr.mxu0 0.0
  %268 = vmatpush2.msra.mxu0 0.0
  %269 = vmatprep.subr.mxu0 0.0
  %270 = vmatpush2.msra.mxu0 0.0
  %271 = vmatprep.subr.mxu0 0.0
  %272 = vmatpush2.msra.mxu0 0.0
  %273 = vmatprep.subr.mxu0 0.0
  %274 = vmatpush2.msra.mxu0 0.0
  %275 = vmatprep.subr.mxu0 0.0
  %276 = vmatpush2.msra.mxu0 0.0
  %277 = vmatprep.subr.mxu0 0.0
  %278 = vmatpush2.msra.mxu0 0.0
  %279 = vmatprep.subr.mxu0 0.0
  %280 = vmatpush2.msra.mxu0 0.0
  %281 = vmatprep.subr.mxu0 0.0
  %282 = vmatpush2.msra.mxu0 0.0
  %283 = vmatprep.subr.mxu0 0.0
  %284 = vmatpush2.msra.mxu0 0.0
  %285 = vmatprep.subr.mxu0 0.0
  %286 = vmatpush2.msra.mxu0 0.0
  %287 = vmatprep.mubr.f32.mxu0 0.0
  %288 = vmatmul.mubr.f32.gmra.mxu0 %v200
  %v289 = vpop.f32.mrf.mxu0
  %v290 = vadd.f32 %v196, %v289
  %v291 = vpop.f32.mrf.mxu0
  %292 = vmatprep.mubr.f32.mxu0 0.0
  %293 = vmatmul.mubr.f32.gmra.mxu0 %v203
  %v294 = vpop.f32.mrf.mxu0
  %v295 = vadd.f32 %v196, %v294
  %v296 = vpop.f32.mrf.mxu0
  %297 = vmatprep.mubr.f32.mxu0 0.0
  %298 = vmatmul.mubr.f32.gmra.mxu0 %v206
  %v299 = vpop.f32.mrf.mxu0
  %v300 = vadd.f32 %v196, %v299
  %v301 = vpop.f32.mrf.mxu0
  %302 = vmatprep.mubr.f32.mxu0 0.0
  %303 = vmatmul.mubr.f32.gmra.mxu0 %v209
  %v304 = vpop.f32.mrf.mxu0
  %v305 = vadd.f32 %v196, %v304
  %v306 = vpop.f32.mrf.mxu0
  %307 = vmatprep.mubr.f32.mxu0 0.0
  %308 = vmatmul.mubr.f32.gmra.mxu0 %v212
  %v309 = vpop.f32.mrf.mxu0
  %v310 = vadd.f32 %v196, %v309
  %v311 = vpop.f32.mrf.mxu0
  %312 = vmatprep.mubr.f32.mxu0 0.0
  %313 = vmatmul.mubr.f32.gmra.mxu0 %v215
  %v314 = vpop.f32.mrf.mxu0
  %v315 = vadd.f32 %v196, %v314
  %v316 = vpop.f32.mrf.mxu0
  %317 = vmatprep.mubr.f32.mxu0 0.0
  %318 = vmatmul.mubr.f32.gmra.mxu0 %v218
  %v319 = vpop.f32.mrf.mxu0
  %v320 = vadd.f32 %v196, %v319
  %v321 = vpop.f32.mrf.mxu0
  %322 = vmatprep.mubr.f32.mxu0 0.0
  %323 = vmatmul.mubr.f32.gmra.mxu0 %v221
  %v324 = vpop.f32.mrf.mxu0
  %v325 = vadd.f32 %v196, %v324
  %v326 = vpop.f32.mrf.mxu0
  %327 = vdwg.mxu0
  %v328 = vtanh.pop %v290
  %v329 = vtanh.pop %v295
  %v330 = vtanh.pop %v300
  %v331 = vtanh.pop %v305
  %v332 = vtanh.pop %v310
  %v333 = vtanh.pop %v315
  %v334 = vtanh.pop %v320
  %v335 = vtanh.pop %v325
  %v336 = vld [vmem:[%s5] sm:$0xff]
  %v337 = vld [vmem:[%s5 + $0x8] sm:$0xff]
  %v338 = vld [vmem:[%s5 + $0x10] sm:$0xff]
  %v339 = vld [vmem:[%s5 + $0x18] sm:$0xff]
  %v340 = vld [vmem:[%s6] sm:$0x1]
  %v342 = vlaneseq
  %v343 = vshrl.u32 %v342, 7
  %v344 = vsub.s32 0, %v343
  %v345 = vrot.slane %v340, %v344
  %v348 = vsel %vm198, %v328, 0
  %v351 = vsel %vm198, %v329, 0
  %v354 = vsel %vm198, %v330, 0
  %v357 = vsel %vm198, %v331, 0
  %v360 = vsel %vm198, %v332, 0
  %v363 = vsel %vm198, %v333, 0
  %v366 = vsel %vm198, %v334, 0
  %v369 = vsel %vm198, %v335, 0
  %371 = vmatprep.subr.mxu0 0.0
  %372 = vmatpush1.msra.mxu0 0.0
  %373 = vmatprep.subr.mxu0 0.0
  %374 = vmatpush1.msra.mxu0 0.0
  %375 = vmatprep.subr.mxu0 0.0
  %376 = vmatpush1.msra.mxu0 0.0
  %377 = vmatprep.subr.mxu0 0.0
  %378 = vmatpush1.msra.mxu0 0.0
  %379 = vmatprep.subr.mxu0 0.0
  %380 = vmatpush1.msra.mxu0 0.0
  %381 = vmatprep.subr.mxu0 0.0
  %382 = vmatpush1.msra.mxu0 0.0
  %383 = vmatprep.subr.mxu0 0.0
  %384 = vmatpush1.msra.mxu0 0.0
  %385 = vmatprep.subr.mxu0 0.0
  %386 = vmatpush1.msra.mxu0 0.0
  %387 = vmatprep.subr.mxu0 0.0
  %388 = vmatpush1.msra.mxu0 0.0
  %389 = vmatprep.subr.mxu0 0.0
  %390 = vmatpush1.msra.mxu0 0.0
  %391 = vmatprep.subr.mxu0 0.0
  %392 = vmatpush1.msra.mxu0 0.0
  %393 = vmatprep.subr.mxu0 0.0
  %394 = vmatpush1.msra.mxu0 0.0
  %395 = vmatprep.subr.mxu0 0.0
  %396 = vmatpush1.msra.mxu0 %v339
  %397 = vmatprep.subr.mxu0 0.0
  %398 = vmatpush1.msra.mxu0 %v338
  %399 = vmatprep.subr.mxu0 0.0
  %400 = vmatpush1.msra.mxu0 %v337
  %401 = vmatprep.subr.mxu0 0.0
  %402 = vmatpush1.msra.mxu0 %v336
  %403 = vmatprep.subr.mxu0 0.0
  %404 = vmatpush2.msra.mxu0 0.0
  %405 = vmatprep.subr.mxu0 0.0
  %406 = vmatpush2.msra.mxu0 0.0
  %407 = vmatprep.subr.mxu0 0.0
  %408 = vmatpush2.msra.mxu0 0.0
  %409 = vmatprep.subr.mxu0 0.0
  %410 = vmatpush2.msra.mxu0 0.0
  %411 = vmatprep.subr.mxu0 0.0
  %412 = vmatpush2.msra.mxu0 0.0
  %413 = vmatprep.subr.mxu0 0.0
  %414 = vmatpush2.msra.mxu0 0.0
  %415 = vmatprep.subr.mxu0 0.0
  %416 = vmatpush2.msra.mxu0 0.0
  %417 = vmatprep.subr.mxu0 0.0
  %418 = vmatpush2.msra.mxu0 0.0
  %419 = vmatprep.subr.mxu0 0.0
  %420 = vmatpush2.msra.mxu0 0.0
  %421 = vmatprep.subr.mxu0 0.0
  %422 = vmatpush2.msra.mxu0 0.0
  %423 = vmatprep.subr.mxu0 0.0
  %424 = vmatpush2.msra.mxu0 0.0
  %425 = vmatprep.subr.mxu0 0.0
  %426 = vmatpush2.msra.mxu0 0.0
  %427 = vmatprep.subr.mxu0 0.0
  %428 = vmatpush2.msra.mxu0 0.0
  %429 = vmatprep.subr.mxu0 0.0
  %430 = vmatpush2.msra.mxu0 0.0
  %431 = vmatprep.subr.mxu0 0.0
  %432 = vmatpush2.msra.mxu0 0.0
  %433 = vmatprep.subr.mxu0 0.0
  %434 = vmatpush2.msra.mxu0 0.0
  %435 = vmatprep.mubr.f32.mxu0 0.0
  %436 = vmatmul.mubr.f32.gmra.mxu0 %v348
  %v437 = vpop.f32.mrf.mxu0
  %v438 = vadd.f32 %v345, %v437
  %v439 = vpop.f32.mrf.mxu0
  %440 = vmatprep.mubr.f32.mxu0 0.0
  %441 = vmatmul.mubr.f32.gmra.mxu0 %v351
  %v442 = vpop.f32.mrf.mxu0
  %v443 = vadd.f32 %v345, %v442
  %v444 = vpop.f32.mrf.mxu0
  %445 = vmatprep.mubr.f32.mxu0 0.0
  %446 = vmatmul.mubr.f32.gmra.mxu0 %v354
  %v447 = vpop.f32.mrf.mxu0
  %v448 = vadd.f32 %v345, %v447
  %v449 = vpop.f32.mrf.mxu0
  %450 = vmatprep.mubr.f32.mxu0 0.0
  %451 = vmatmul.mubr.f32.gmra.mxu0 %v357
  %v452 = vpop.f32.mrf.mxu0
  %v453 = vadd.f32 %v345, %v452
  %v454 = vpop.f32.mrf.mxu0
  %455 = vmatprep.mubr.f32.mxu0 0.0
  %456 = vmatmul.mubr.f32.gmra.mxu0 %v360
  %v457 = vpop.f32.mrf.mxu0
  %v458 = vadd.f32 %v345, %v457
  %v459 = vpop.f32.mrf.mxu0
  %460 = vmatprep.mubr.f32.mxu0 0.0
  %461 = vmatmul.mubr.f32.gmra.mxu0 %v363
  %v462 = vpop.f32.mrf.mxu0
  %v463 = vadd.f32 %v345, %v462
  %v464 = vpop.f32.mrf.mxu0
  %465 = vmatprep.mubr.f32.mxu0 0.0
  %466 = vmatmul.mubr.f32.gmra.mxu0 %v366
  %v467 = vpop.f32.mrf.mxu0
  %v468 = vadd.f32 %v345, %v467
  %v469 = vpop.f32.mrf.mxu0
  %470 = vmatprep.mubr.f32.mxu0 0.0
  %471 = vmatmul.mubr.f32.gmra.mxu0 %v369
  %v472 = vpop.f32.mrf.mxu0
  %v473 = vadd.f32 %v345, %v472
  %v474 = vpop.f32.mrf.mxu0
  %475 = vdwg.mxu0
  %v476 = vtanh.pop %v438
  %v477 = vtanh.pop %v443
  %v478 = vtanh.pop %v448
  %v479 = vtanh.pop %v453
  %v480 = vtanh.pop %v458
  %v481 = vtanh.pop %v463
  %v482 = vtanh.pop %v468
  %v483 = vtanh.pop %v473
  %v484 = vld [vmem:[%s7] sm:$0xff]
  %v485 = vld [vmem:[%s7 + $0x8] sm:$0xff]
  %v486 = vld [vmem:[%s7 + $0x10] sm:$0xff]
  %v487 = vld [vmem:[%s7 + $0x18] sm:$0xff]
  %v488 = vld [vmem:[%s8] sm:$0x1]
  %v490 = vlaneseq
  %v491 = vshrl.u32 %v490, 7
  %v492 = vsub.s32 0, %v491
  %v493 = vrot.slane %v488, %v492
  %v496 = vsel %vm198, %v476, 0
  %v499 = vsel %vm198, %v477, 0
  %v502 = vsel %vm198, %v478, 0
  %v505 = vsel %vm198, %v479, 0
  %v508 = vsel %vm198, %v480, 0
  %v511 = vsel %vm198, %v481, 0
  %v514 = vsel %vm198, %v482, 0
  %v517 = vsel %vm198, %v483, 0
  %519 = vmatprep.subr.mxu0 0.0
  %520 = vmatpush1.msra.mxu0 0.0
  %521 = vmatprep.subr.mxu0 0.0
  %522 = vmatpush1.msra.mxu0 0.0
  %523 = vmatprep.subr.mxu0 0.0
  %524 = vmatpush1.msra.mxu0 0.0
  %525 = vmatprep.subr.mxu0 0.0
  %526 = vmatpush1.msra.mxu0 0.0
  %527 = vmatprep.subr.mxu0 0.0
  %528 = vmatpush1.msra.mxu0 0.0
  %529 = vmatprep.subr.mxu0 0.0
  %530 = vmatpush1.msra.mxu0 0.0
  %531 = vmatprep.subr.mxu0 0.0
  %532 = vmatpush1.msra.mxu0 0.0
  %533 = vmatprep.subr.mxu0 0.0
  %534 = vmatpush1.msra.mxu0 0.0
  %535 = vmatprep.subr.mxu0 0.0
  %536 = vmatpush1.msra.mxu0 0.0
  %537 = vmatprep.subr.mxu0 0.0
  %538 = vmatpush1.msra.mxu0 0.0
  %539 = vmatprep.subr.mxu0 0.0
  %540 = vmatpush1.msra.mxu0 0.0
  %541 = vmatprep.subr.mxu0 0.0
  %542 = vmatpush1.msra.mxu0 0.0
  %543 = vmatprep.subr.mxu0 0.0
  %544 = vmatpush1.msra.mxu0 %v487
  %545 = vmatprep.subr.mxu0 0.0
  %546 = vmatpush1.msra.mxu0 %v486
  %547 = vmatprep.subr.mxu0 0.0
  %548 = vmatpush1.msra.mxu0 %v485
  %549 = vmatprep.subr.mxu0 0.0
  %550 = vmatpush1.msra.mxu0 %v484
  %551 = vmatprep.subr.mxu0 0.0
  %552 = vmatpush2.msra.mxu0 0.0
  %553 = vmatprep.subr.mxu0 0.0
  %554 = vmatpush2.msra.mxu0 0.0
  %555 = vmatprep.subr.mxu0 0.0
  %556 = vmatpush2.msra.mxu0 0.0
  %557 = vmatprep.subr.mxu0 0.0
  %558 = vmatpush2.msra.mxu0 0.0
  %559 = vmatprep.subr.mxu0 0.0
  %560 = vmatpush2.msra.mxu0 0.0
  %561 = vmatprep.subr.mxu0 0.0
  %562 = vmatpush2.msra.mxu0 0.0
  %563 = vmatprep.subr.mxu0 0.0
  %564 = vmatpush2.msra.mxu0 0.0
  %565 = vmatprep.subr.mxu0 0.0
  %566 = vmatpush2.msra.mxu0 0.0
  %567 = vmatprep.subr.mxu0 0.0
  %568 = vmatpush2.msra.mxu0 0.0
  %569 = vmatprep.subr.mxu0 0.0
  %570 = vmatpush2.msra.mxu0 0.0
  %571 = vmatprep.subr.mxu0 0.0
  %572 = vmatpush2.msra.mxu0 0.0
  %573 = vmatprep.subr.mxu0 0.0
  %574 = vmatpush2.msra.mxu0 0.0
  %575 = vmatprep.subr.mxu0 0.0
  %576 = vmatpush2.msra.mxu0 0.0
  %577 = vmatprep.subr.mxu0 0.0
  %578 = vmatpush2.msra.mxu0 0.0
  %579 = vmatprep.subr.mxu0 0.0
  %580 = vmatpush2.msra.mxu0 0.0
  %581 = vmatprep.subr.mxu0 0.0
  %582 = vmatpush2.msra.mxu0 0.0
  %583 = vmatprep.mubr.f32.mxu0 0.0
  %584 = vmatmul.mubr.f32.gmra.mxu0 %v496
  %v585 = vpop.f32.mrf.mxu0
  %v586 = vadd.f32 %v493, %v585
  %v587 = vpop.f32.mrf.mxu0
  %588 = vmatprep.mubr.f32.mxu0 0.0
  %589 = vmatmul.mubr.f32.gmra.mxu0 %v499
  %v590 = vpop.f32.mrf.mxu0
  %v591 = vadd.f32 %v493, %v590
  %v592 = vpop.f32.mrf.mxu0
  %593 = vmatprep.mubr.f32.mxu0 0.0
  %594 = vmatmul.mubr.f32.gmra.mxu0 %v502
  %v595 = vpop.f32.mrf.mxu0
  %v596 = vadd.f32 %v493, %v595
  %v597 = vpop.f32.mrf.mxu0
  %598 = vmatprep.mubr.f32.mxu0 0.0
  %599 = vmatmul.mubr.f32.gmra.mxu0 %v505
  %v600 = vpop.f32.mrf.mxu0
  %v601 = vadd.f32 %v493, %v600
  %v602 = vpop.f32.mrf.mxu0
  %603 = vmatprep.mubr.f32.mxu0 0.0
  %604 = vmatmul.mubr.f32.gmra.mxu0 %v508
  %v605 = vpop.f32.mrf.mxu0
  %v606 = vadd.f32 %v493, %v605
  %v607 = vpop.f32.mrf.mxu0
  %608 = vmatprep.mubr.f32.mxu0 0.0
  %609 = vmatmul.mubr.f32.gmra.mxu0 %v511
  %v610 = vpop.f32.mrf.mxu0
  %v611 = vadd.f32 %v493, %v610
  %v612 = vpop.f32.mrf.mxu0
  %613 = vmatprep.mubr.f32.mxu0 0.0
  %614 = vmatmul.mubr.f32.gmra.mxu0 %v514
  %v615 = vpop.f32.mrf.mxu0
  %v616 = vadd.f32 %v493, %v615
  %v617 = vpop.f32.mrf.mxu0
  %618 = vmatprep.mubr.f32.mxu0 0.0
  %619 = vmatmul.mubr.f32.gmra.mxu0 %v517
  %v620 = vpop.f32.mrf.mxu0
  %v621 = vadd.f32 %v493, %v620
  %v622 = vpop.f32.mrf.mxu0
  %623 = vdwg.mxu0
  %vm624 = vcmask 31744
  %625 = vst.msk [vmem:[%s9] sm:$0xff] %vm624, %v586
  %626 = vst.msk [vmem:[%s9 + $0x8] sm:$0xff] %vm624, %v591
  %627 = vst.msk [vmem:[%s9 + $0x10] sm:$0xff] %vm624, %v596
  %628 = vst.msk [vmem:[%s9 + $0x18] sm:$0xff] %vm624, %v601
  %629 = vst.msk [vmem:[%s9 + $0x20] sm:$0xff] %vm624, %v606
  %630 = vst.msk [vmem:[%s9 + $0x28] sm:$0xff] %vm624, %v611
  %631 = vst.msk [vmem:[%s9 + $0x30] sm:$0xff] %vm624, %v616
  %632 = vst.msk [vmem:[%s9 + $0x38] sm:$0xff] %vm624, %v621
  // Predicated region
  $region38: #{tpu_custom_call.1} parent=0 // pred_check
    _
  $region39: #{tpu_custom_call.1} parent=0 // pred_check_branch
    %634 = sbr.rel (0) target = $region41
  $region40: #{tpu_custom_call.1} parent=0 // pred_region
    _
  $region41: #{tpu_custom_call.1} parent=0 // pred_fallthru
    _
  // Predicated region
  $region42: #{tpu_custom_call.1} parent=0 // pred_check
    _
  $region43: #{tpu_custom_call.1} parent=0 // pred_check_branch
    %636 = sbr.rel (0) target = $region45
  $region44: #{tpu_custom_call.1} parent=0 // pred_region
    _
  $region45: #{tpu_custom_call.1} parent=0 // pred_fallthru
    _

</llo_original>
